<compile_context>
chip_gen: v7x
topology: tpu7x:2x2x1
jax: 0.10.0
libtpu: 0.0.40
codegen_flags: <defaults>
</compile_context>

<pallas_src>
import functools

import numpy as np
import jax
import jax.numpy as jnp
from jax.experimental import pallas as pl
from jax.experimental.pallas import tpu as pltpu

_EPS = 1e-5


# ---------------------------------------------------------------------------
# Kernel
# ---------------------------------------------------------------------------

def _basic2d_block_kernel(x_ref, m_ref, w1_ref, b1_ref, w2_ref, b2_ref, o_ref,
                          *, H, W, nb):
    """Fused conv3x3+BN+ReLU -> conv3x3+BN+ReLU for `nb` images.

    x_ref  : (nb, Cp, H*W)   input images, channels on sublanes (Cp % 8 == 0)
    m_ref  : (9, nb*H*W)     0/1 validity mask per conv tap (per-image tiled)
    w*_ref : (Cout, 9*C)     im2col conv weights with BN scale folded in
    b*_ref : (Cout, 1)       folded BN shift
    o_ref  : (nb, Cout, H*W) output
    """
    HW = H * W
    L = nb * HW

    def conv3x3_bn_relu(z, w_ref, shift):
        # Build the (9*C, L) im2col RHS from lane-rotated copies of z (no scratch,
        # no halo): roll uses the XLU; the mask kills wrapped / out-of-image lanes.
        taps = []
        k = 0
        for oh in (-1, 0, 1):
            for ow in (-1, 0, 1):
                d = oh * W + ow
                if d == 0:
                    t = z                                   # centre tap: always valid
                else:
                    t = pltpu.roll(z, (-d) % L, 1)          # t[:, p] = z[:, (p + d) % L]
                    t = t * m_ref[k:k + 1, :]
                taps.append(t)
                k += 1
        rhs = jnp.concatenate(taps, axis=0)                 # (9*C, L), 8-aligned chunks
        acc = jnp.dot(w_ref[...], rhs, preferred_element_type=jnp.float32)
        return jnp.maximum(acc + shift, 0.0)                # BN scale already in w

    # Lane-concatenate the nb images of this step into one (Cp, nb*HW) matrix.
    if nb == 1:
        x2d = x_ref[0].astype(jnp.float32)
    else:
        x2d = jnp.concatenate([x_ref[b].astype(jnp.float32) for b in range(nb)],
                              axis=-1)

    y = conv3x3_bn_relu(x2d, w1_ref, b1_ref[...])
    y = conv3x3_bn_relu(y, w2_ref, b2_ref[...])

    for b in range(nb):                                     # lane-dense 256-wide stores
        o_ref[b] = y[:, b * HW:(b + 1) * HW].astype(o_ref.dtype)


# ---------------------------------------------------------------------------
# Wrapper (parameter prep is tiny / constant; activation reshapes are views)
# ---------------------------------------------------------------------------

def _make_tap_masks(H, W):
    """(9, H*W) 0/1 masks: tap k=(oh+1)*3+(ow+1) is valid where the shifted pixel
    (h+oh, w+ow) lies inside the image (zero-padding semantics)."""
    hh, ww = np.meshgrid(np.arange(H), np.arange(W), indexing="ij")
    masks = []
    for oh in (-1, 0, 1):
        for ow in (-1, 0, 1):
            valid = ((hh + oh >= 0) & (hh + oh < H) &
                     (ww + ow >= 0) & (ww + ow < W))
            masks.append(valid.reshape(-1))
    return np.stack(masks).astype(np.float32)


def _fold_bn(gamma, beta, mean, var):
    scale = gamma / jnp.sqrt(var + _EPS)
    shift = beta - mean * scale
    return scale, shift


def _im2col_weight(w, c_pad, scale):
    """(Cout, Cin, 3, 3) torch conv weight -> (Cout, 9*c_pad), BN scale folded.

    Column index = k*c_pad + cin with k = (oh+1)*3 + (ow+1) (matches the kernel)."""
    cout, cin = w.shape[0], w.shape[1]
    wt = jnp.transpose(w, (0, 2, 3, 1))                     # (Cout, 3, 3, Cin)
    if c_pad != cin:
        wt = jnp.pad(wt, ((0, 0), (0, 0), (0, 0), (0, c_pad - cin)))
    return wt.reshape(cout, 9 * c_pad) * scale[:, None]


def _pick_nb(N):
    """Images per grid step: amortize step overhead, prefer an even grid (v7x)."""
    for require_even in (True, False):
        for nb in (16, 8, 4, 2, 1):
            if N % nb == 0 and (not require_even or (N // nb) % 2 == 0):
                return nb
    return 1


def basic2d_block_pallas(x, p, nb=None):
    """x: (N, Cin, H, W) float32; p: torch-layout parameter dict (stride=(1,1))."""
    N, Cin, H, W = x.shape
    Cout = p['w1'].shape[0]
    HW = H * W
    assert HW % 128 == 0, "lane-dense layout assumes H*W to be a multiple of 128"
    if nb is None:
        nb = _pick_nb(N)
    assert N % nb == 0
    L = nb * HW

    # Pad input channels to a sublane multiple so im2col chunks are vreg-aligned.
    cp1 = max(8, ((Cin + 7) // 8) * 8)
    x_flat = x.reshape(N, Cin, HW)                          # metadata-only reshape
    if cp1 != Cin:
        x_flat = jnp.pad(x_flat, ((0, 0), (0, cp1 - Cin), (0, 0)))

    masks = jnp.asarray(np.tile(_make_tap_masks(H, W), (1, nb)))   # (9, L) constant

    s1, b1 = _fold_bn(p['bn1_g'], p['bn1_b'], p['bn1_m'], p['bn1_v'])
    s2, b2 = _fold_bn(p['bn2_g'], p['bn2_b'], p['bn2_m'], p['bn2_v'])
    w1m = _im2col_weight(p['w1'], cp1, s1)                  # (Cout, 9*cp1)
    w2m = _im2col_weight(p['w2'], Cout, s2)                 # (Cout, 9*Cout)
    b1 = b1.reshape(-1, 1)
    b2 = b2.reshape(-1, 1)

    kern = functools.partial(_basic2d_block_kernel, H=H, W=W, nb=nb)
    out = pl.pallas_call(
        kern,
        out_shape=jax.ShapeDtypeStruct((N, Cout, HW), jnp.float32),
        grid=(N // nb,),
        in_specs=[
            pl.BlockSpec((nb, cp1, HW), lambda n: (n, 0, 0)),
            pl.BlockSpec((9, L), lambda n: (0, 0)),
            pl.BlockSpec((Cout, 9 * cp1), lambda n: (0, 0)),
            pl.BlockSpec((Cout, 1), lambda n: (0, 0)),
            pl.BlockSpec((Cout, 9 * Cout), lambda n: (0, 0)),
            pl.BlockSpec((Cout, 1), lambda n: (0, 0)),
        ],
        out_specs=pl.BlockSpec((nb, Cout, HW), lambda n: (n, 0, 0)),
        compiler_params=pltpu.CompilerParams(
            dimension_semantics=("parallel",)),
    )(x_flat, masks, w1m, b1, w2m, b2)
    return out.reshape(N, Cout, H, W)                       # metadata-only reshape


# ---------------------------------------------------------------------------
# Pure-JAX reference (mirrors the PyTorch forward, eval-mode BN)
# ---------------------------------------------------------------------------

def basic2d_block_ref(x, p):
    dn = ('NCHW', 'OIHW', 'NCHW')

    def conv(z, w):
        return jax.lax.conv_general_dilated(z, w, (1, 1), [(1, 1), (1, 1)],
                                            dimension_numbers=dn)

    def bn(z, g, b, m, v):
        sh = (1, -1, 1, 1)
        return (z - m.reshape(sh)) * (g.reshape(sh) / jnp.sqrt(v.reshape(sh) + _EPS)) + b.reshape(sh)

    y = jnp.maximum(bn(conv(x, p['w1']), p['bn1_g'], p['bn1_b'], p['bn1_m'], p['bn1_v']), 0.0)
    y = jnp.maximum(bn(conv(y, p['w2']), p['bn2_g'], p['bn2_b'], p['bn2_m'], p['bn2_v']), 0.0)
    return y


# ---------------------------------------------------------------------------
# Main
# ---------------------------------------------------------------------------

if __name__ == "__main__":
    N, Cin, Cout, H, W = 2, 4, 8, 16, 16

    keys = jax.random.split(jax.random.PRNGKey(0), 12)
    x = jax.random.normal(keys[0], (N, Cin, H, W), jnp.float32)

    p = {
        # torch-layout conv weights: (out, in, kH, kW), bias=False
        'w1': 0.1 * jax.random.normal(keys[1], (Cout, Cin, 3, 3), jnp.float32),
        'w2': 0.1 * jax.random.normal(keys[2], (Cout, Cout, 3, 3), jnp.float32),
    }
    ki = 3
    for name in ['bn1', 'bn2']:
        p[name + '_g'] = 1.0 + 0.1 * jax.random.normal(keys[ki], (Cout,), jnp.float32); ki += 1
        p[name + '_b'] = 0.1 * jax.random.normal(keys[ki], (Cout,), jnp.float32); ki += 1
        p[name + '_m'] = 0.1 * jax.random.normal(keys[ki], (Cout,), jnp.float32); ki += 1
        p[name + '_v'] = 1.0 + 0.5 * jax.random.uniform(keys[ki], (Cout,), jnp.float32); ki += 1

    out = jax.block_until_ready(basic2d_block_pallas(x, p))
    ref = jax.block_until_ready(basic2d_block_ref(x, p))

    assert out.shape == (N, Cout, H, W), out.shape
    np.testing.assert_allclose(np.asarray(out), np.asarray(ref), atol=1e-2, rtol=1e-2)
    print("KERNEL_OK")
</pallas_src>

<mosaic_0001>
module attributes {stable_mosaic.version = 11 : i64} {
  func.func @_basic2d_block_kernel(%arg0: i32, %arg1: memref<1x8x256xf32, #tpu.memory_space<vmem>>, %arg2: memref<9x256xf32, #tpu.memory_space<vmem>>, %arg3: memref<8x72xf32, #tpu.memory_space<vmem>>, %arg4: memref<8x1xf32, #tpu.memory_space<vmem>>, %arg5: memref<8x72xf32, #tpu.memory_space<vmem>>, %arg6: memref<8x1xf32, #tpu.memory_space<vmem>>, %arg7: memref<1x8x256xf32, #tpu.memory_space<vmem>>) attributes {dimension_semantics = [#tpu.dimension_semantics<parallel>], iteration_bounds = array<i64: 2>, scalar_prefetch = 0 : i64, scratch_operands = 0 : i64, tpu.core_type = #tpu.core_type<tc>, window_params = [{transform_indices = @transform_0, window_bounds = array<i64: 1, 8, 256>}, {pipeline_mode = #tpu.pipeline_mode<synchronous>, transform_indices = @transform_1, window_bounds = array<i64: 9, 256>}, {pipeline_mode = #tpu.pipeline_mode<synchronous>, transform_indices = @transform_2, window_bounds = array<i64: 8, 72>}, {pipeline_mode = #tpu.pipeline_mode<synchronous>, transform_indices = @transform_3, window_bounds = array<i64: 8, 1>}, {pipeline_mode = #tpu.pipeline_mode<synchronous>, transform_indices = @transform_4, window_bounds = array<i64: 8, 72>}, {pipeline_mode = #tpu.pipeline_mode<synchronous>, transform_indices = @transform_5, window_bounds = array<i64: 8, 1>}, {transform_indices = @transform_6, window_bounds = array<i64: 1, 8, 256>}]} {
    %c0 = arith.constant 0 : index
    %c0_0 = arith.constant 0 : index
    %c0_1 = arith.constant 0 : index
    %0 = vector.load %arg1[%c0, %c0_0, %c0_1] : memref<1x8x256xf32, #tpu.memory_space<vmem>>, vector<1x8x256xf32>
    %1 = vector.shape_cast %0 : vector<1x8x256xf32> to vector<8x256xf32>
    %c0_2 = arith.constant 0 : index
    %c0_3 = arith.constant 0 : index
    %2 = vector.load %arg4[%c0_2, %c0_3] : memref<8x1xf32, #tpu.memory_space<vmem>>, vector<8x1xf32>
    %c17_i32 = arith.constant 17 : i32
    %3 = tpu.dynamic_rotate %1 by %c17_i32 dim 1 : vector<8x256xf32>, i32 -> vector<8x256xf32>
    %c0_4 = arith.constant 0 : index
    %c0_5 = arith.constant 0 : index
    %4 = vector.load %arg2[%c0_4, %c0_5] : memref<9x256xf32, #tpu.memory_space<vmem>>, vector<1x256xf32>
    %5 = vector.broadcast %4 : vector<1x256xf32> to vector<8x256xf32>
    %6 = arith.mulf %3, %5 : vector<8x256xf32>
    %c16_i32 = arith.constant 16 : i32
    %7 = tpu.dynamic_rotate %1 by %c16_i32 dim 1 : vector<8x256xf32>, i32 -> vector<8x256xf32>
    %c1 = arith.constant 1 : index
    %c0_6 = arith.constant 0 : index
    %8 = vector.load %arg2[%c1, %c0_6] : memref<9x256xf32, #tpu.memory_space<vmem>>, vector<1x256xf32>
    %9 = vector.broadcast %8 : vector<1x256xf32> to vector<8x256xf32>
    %10 = arith.mulf %7, %9 : vector<8x256xf32>
    %c15_i32 = arith.constant 15 : i32
    %11 = tpu.dynamic_rotate %1 by %c15_i32 dim 1 : vector<8x256xf32>, i32 -> vector<8x256xf32>
    %c2 = arith.constant 2 : index
    %c0_7 = arith.constant 0 : index
    %12 = vector.load %arg2[%c2, %c0_7] : memref<9x256xf32, #tpu.memory_space<vmem>>, vector<1x256xf32>
    %13 = vector.broadcast %12 : vector<1x256xf32> to vector<8x256xf32>
    %14 = arith.mulf %11, %13 : vector<8x256xf32>
    %c1_i32 = arith.constant 1 : i32
    %15 = tpu.dynamic_rotate %1 by %c1_i32 dim 1 : vector<8x256xf32>, i32 -> vector<8x256xf32>
    %c3 = arith.constant 3 : index
    %c0_8 = arith.constant 0 : index
    %16 = vector.load %arg2[%c3, %c0_8] : memref<9x256xf32, #tpu.memory_space<vmem>>, vector<1x256xf32>
    %17 = vector.broadcast %16 : vector<1x256xf32> to vector<8x256xf32>
    %18 = arith.mulf %15, %17 : vector<8x256xf32>
    %c255_i32 = arith.constant 255 : i32
    %19 = tpu.dynamic_rotate %1 by %c255_i32 dim 1 : vector<8x256xf32>, i32 -> vector<8x256xf32>
    %c5 = arith.constant 5 : index
    %c0_9 = arith.constant 0 : index
    %20 = vector.load %arg2[%c5, %c0_9] : memref<9x256xf32, #tpu.memory_space<vmem>>, vector<1x256xf32>
    %21 = vector.broadcast %20 : vector<1x256xf32> to vector<8x256xf32>
    %22 = arith.mulf %19, %21 : vector<8x256xf32>
    %c241_i32 = arith.constant 241 : i32
    %23 = tpu.dynamic_rotate %1 by %c241_i32 dim 1 : vector<8x256xf32>, i32 -> vector<8x256xf32>
    %c6 = arith.constant 6 : index
    %c0_10 = arith.constant 0 : index
    %24 = vector.load %arg2[%c6, %c0_10] : memref<9x256xf32, #tpu.memory_space<vmem>>, vector<1x256xf32>
    %25 = vector.broadcast %24 : vector<1x256xf32> to vector<8x256xf32>
    %26 = arith.mulf %23, %25 : vector<8x256xf32>
    %c240_i32 = arith.constant 240 : i32
    %27 = tpu.dynamic_rotate %1 by %c240_i32 dim 1 : vector<8x256xf32>, i32 -> vector<8x256xf32>
    %c7 = arith.constant 7 : index
    %c0_11 = arith.constant 0 : index
    %28 = vector.load %arg2[%c7, %c0_11] : memref<9x256xf32, #tpu.memory_space<vmem>>, vector<1x256xf32>
    %29 = vector.broadcast %28 : vector<1x256xf32> to vector<8x256xf32>
    %30 = arith.mulf %27, %29 : vector<8x256xf32>
    %c239_i32 = arith.constant 239 : i32
    %31 = tpu.dynamic_rotate %1 by %c239_i32 dim 1 : vector<8x256xf32>, i32 -> vector<8x256xf32>
    %c8 = arith.constant 8 : index
    %c0_12 = arith.constant 0 : index
    %32 = vector.load %arg2[%c8, %c0_12] : memref<9x256xf32, #tpu.memory_space<vmem>>, vector<1x256xf32>
    %33 = vector.broadcast %32 : vector<1x256xf32> to vector<8x256xf32>
    %34 = arith.mulf %31, %33 : vector<8x256xf32>
    %35 = tpu.concatenate %6, %10, %14, %18, %1, %22, %26, %30, %34 in 0 : vector<8x256xf32>, vector<8x256xf32>, vector<8x256xf32>, vector<8x256xf32>, vector<8x256xf32>, vector<8x256xf32>, vector<8x256xf32>, vector<8x256xf32>, vector<8x256xf32> -> vector<72x256xf32>
    %c0_13 = arith.constant 0 : index
    %c0_14 = arith.constant 0 : index
    %36 = vector.load %arg3[%c0_13, %c0_14] : memref<8x72xf32, #tpu.memory_space<vmem>>, vector<8x72xf32>
    %cst = arith.constant dense<0.000000e+00> : vector<8x256xf32>
    %37 = tpu.matmul %36, %35, %cst {dimension_numbers = #tpu.dot_dimension_numbers<[1], [0], [0], [1], [0, 0, 1, 1], [], []>} : vector<8x72xf32>, vector<72x256xf32>, vector<8x256xf32> -> vector<8x256xf32>
    %38 = vector.broadcast %2 : vector<8x1xf32> to vector<8x256xf32>
    %39 = arith.addf %37, %38 : vector<8x256xf32>
    %cst_15 = arith.constant 0.000000e+00 : f32
    %40 = vector.broadcast %cst_15 : f32 to vector<8x256xf32>
    %41 = arith.maximumf %39, %40 : vector<8x256xf32>
    %c0_16 = arith.constant 0 : index
    %c0_17 = arith.constant 0 : index
    %42 = vector.load %arg6[%c0_16, %c0_17] : memref<8x1xf32, #tpu.memory_space<vmem>>, vector<8x1xf32>
    %c17_i32_18 = arith.constant 17 : i32
    %43 = tpu.dynamic_rotate %41 by %c17_i32_18 dim 1 : vector<8x256xf32>, i32 -> vector<8x256xf32>
    %c0_19 = arith.constant 0 : index
    %c0_20 = arith.constant 0 : index
    %44 = vector.load %arg2[%c0_19, %c0_20] : memref<9x256xf32, #tpu.memory_space<vmem>>, vector<1x256xf32>
    %45 = vector.broadcast %44 : vector<1x256xf32> to vector<8x256xf32>
    %46 = arith.mulf %43, %45 : vector<8x256xf32>
    %c16_i32_21 = arith.constant 16 : i32
    %47 = tpu.dynamic_rotate %41 by %c16_i32_21 dim 1 : vector<8x256xf32>, i32 -> vector<8x256xf32>
    %c1_22 = arith.constant 1 : index
    %c0_23 = arith.constant 0 : index
    %48 = vector.load %arg2[%c1_22, %c0_23] : memref<9x256xf32, #tpu.memory_space<vmem>>, vector<1x256xf32>
    %49 = vector.broadcast %48 : vector<1x256xf32> to vector<8x256xf32>
    %50 = arith.mulf %47, %49 : vector<8x256xf32>
    %c15_i32_24 = arith.constant 15 : i32
    %51 = tpu.dynamic_rotate %41 by %c15_i32_24 dim 1 : vector<8x256xf32>, i32 -> vector<8x256xf32>
    %c2_25 = arith.constant 2 : index
    %c0_26 = arith.constant 0 : index
    %52 = vector.load %arg2[%c2_25, %c0_26] : memref<9x256xf32, #tpu.memory_space<vmem>>, vector<1x256xf32>
    %53 = vector.broadcast %52 : vector<1x256xf32> to vector<8x256xf32>
    %54 = arith.mulf %51, %53 : vector<8x256xf32>
    %c1_i32_27 = arith.constant 1 : i32
    %55 = tpu.dynamic_rotate %41 by %c1_i32_27 dim 1 : vector<8x256xf32>, i32 -> vector<8x256xf32>
    %c3_28 = arith.constant 3 : index
    %c0_29 = arith.constant 0 : index
    %56 = vector.load %arg2[%c3_28, %c0_29] : memref<9x256xf32, #tpu.memory_space<vmem>>, vector<1x256xf32>
    %57 = vector.broadcast %56 : vector<1x256xf32> to vector<8x256xf32>
    %58 = arith.mulf %55, %57 : vector<8x256xf32>
    %c255_i32_30 = arith.constant 255 : i32
    %59 = tpu.dynamic_rotate %41 by %c255_i32_30 dim 1 : vector<8x256xf32>, i32 -> vector<8x256xf32>
    %c5_31 = arith.constant 5 : index
    %c0_32 = arith.constant 0 : index
    %60 = vector.load %arg2[%c5_31, %c0_32] : memref<9x256xf32, #tpu.memory_space<vmem>>, vector<1x256xf32>
    %61 = vector.broadcast %60 : vector<1x256xf32> to vector<8x256xf32>
    %62 = arith.mulf %59, %61 : vector<8x256xf32>
    %c241_i32_33 = arith.constant 241 : i32
    %63 = tpu.dynamic_rotate %41 by %c241_i32_33 dim 1 : vector<8x256xf32>, i32 -> vector<8x256xf32>
    %c6_34 = arith.constant 6 : index
    %c0_35 = arith.constant 0 : index
    %64 = vector.load %arg2[%c6_34, %c0_35] : memref<9x256xf32, #tpu.memory_space<vmem>>, vector<1x256xf32>
    %65 = vector.broadcast %64 : vector<1x256xf32> to vector<8x256xf32>
    %66 = arith.mulf %63, %65 : vector<8x256xf32>
    %c240_i32_36 = arith.constant 240 : i32
    %67 = tpu.dynamic_rotate %41 by %c240_i32_36 dim 1 : vector<8x256xf32>, i32 -> vector<8x256xf32>
    %c7_37 = arith.constant 7 : index
    %c0_38 = arith.constant 0 : index
    %68 = vector.load %arg2[%c7_37, %c0_38] : memref<9x256xf32, #tpu.memory_space<vmem>>, vector<1x256xf32>
    %69 = vector.broadcast %68 : vector<1x256xf32> to vector<8x256xf32>
    %70 = arith.mulf %67, %69 : vector<8x256xf32>
    %c239_i32_39 = arith.constant 239 : i32
    %71 = tpu.dynamic_rotate %41 by %c239_i32_39 dim 1 : vector<8x256xf32>, i32 -> vector<8x256xf32>
    %c8_40 = arith.constant 8 : index
    %c0_41 = arith.constant 0 : index
    %72 = vector.load %arg2[%c8_40, %c0_41] : memref<9x256xf32, #tpu.memory_space<vmem>>, vector<1x256xf32>
    %73 = vector.broadcast %72 : vector<1x256xf32> to vector<8x256xf32>
    %74 = arith.mulf %71, %73 : vector<8x256xf32>
    %75 = tpu.concatenate %46, %50, %54, %58, %41, %62, %66, %70, %74 in 0 : vector<8x256xf32>, vector<8x256xf32>, vector<8x256xf32>, vector<8x256xf32>, vector<8x256xf32>, vector<8x256xf32>, vector<8x256xf32>, vector<8x256xf32>, vector<8x256xf32> -> vector<72x256xf32>
    %c0_42 = arith.constant 0 : index
    %c0_43 = arith.constant 0 : index
    %76 = vector.load %arg5[%c0_42, %c0_43] : memref<8x72xf32, #tpu.memory_space<vmem>>, vector<8x72xf32>
    %cst_44 = arith.constant dense<0.000000e+00> : vector<8x256xf32>
    %77 = tpu.matmul %76, %75, %cst_44 {dimension_numbers = #tpu.dot_dimension_numbers<[1], [0], [0], [1], [0, 0, 1, 1], [], []>} : vector<8x72xf32>, vector<72x256xf32>, vector<8x256xf32> -> vector<8x256xf32>
    %78 = vector.broadcast %42 : vector<8x1xf32> to vector<8x256xf32>
    %79 = arith.addf %77, %78 : vector<8x256xf32>
    %cst_45 = arith.constant 0.000000e+00 : f32
    %80 = vector.broadcast %cst_45 : f32 to vector<8x256xf32>
    %81 = arith.maximumf %79, %80 : vector<8x256xf32>
    %c0_46 = arith.constant 0 : index
    %c0_47 = arith.constant 0 : index
    %c0_48 = arith.constant 0 : index
    %82 = vector.load %arg7[%c0_46, %c0_47, %c0_48] : memref<1x8x256xf32, #tpu.memory_space<vmem>>, vector<1x8x256xf32>
    %83 = vector.shape_cast %82 : vector<1x8x256xf32> to vector<8x256xf32>
    %84 = vector.shape_cast %81 : vector<8x256xf32> to vector<1x8x256xf32>
    tpu.vector_store %arg7[%c0_46, %c0_47, %c0_48], %84 {strides = array<i32>} : memref<1x8x256xf32, #tpu.memory_space<vmem>>, vector<1x8x256xf32>,
    return
  }
  func.func @transform_0(%arg0: i32) -> (i32, i32, i32) {
    %c0_i32 = arith.constant 0 : i32
    %c0_i32_0 = arith.constant 0 : i32
    %c0_i32_1 = arith.constant 0 : i32
    return %arg0, %c0_i32, %c0_i32_0 : i32, i32, i32
  }
  func.func @transform_1(%arg0: i32) -> (i32, i32) {
    %c0_i32 = arith.constant 0 : i32
    %c0_i32_0 = arith.constant 0 : i32
    %c0_i32_1 = arith.constant 0 : i32
    return %c0_i32, %c0_i32_0 : i32, i32
  }
  func.func @transform_2(%arg0: i32) -> (i32, i32) {
    %c0_i32 = arith.constant 0 : i32
    %c0_i32_0 = arith.constant 0 : i32
    %c0_i32_1 = arith.constant 0 : i32
    return %c0_i32, %c0_i32_0 : i32, i32
  }
  func.func @transform_3(%arg0: i32) -> (i32, i32) {
    %c0_i32 = arith.constant 0 : i32
    %c0_i32_0 = arith.constant 0 : i32
    %c0_i32_1 = arith.constant 0 : i32
    return %c0_i32, %c0_i32_0 : i32, i32
  }
  func.func @transform_4(%arg0: i32) -> (i32, i32) {
    %c0_i32 = arith.constant 0 : i32
    %c0_i32_0 = arith.constant 0 : i32
    %c0_i32_1 = arith.constant 0 : i32
    return %c0_i32, %c0_i32_0 : i32, i32
  }
  func.func @transform_5(%arg0: i32) -> (i32, i32) {
    %c0_i32 = arith.constant 0 : i32
    %c0_i32_0 = arith.constant 0 : i32
    %c0_i32_1 = arith.constant 0 : i32
    return %c0_i32, %c0_i32_0 : i32, i32
  }
  func.func @transform_6(%arg0: i32) -> (i32, i32, i32) {
    %c0_i32 = arith.constant 0 : i32
    %c0_i32_0 = arith.constant 0 : i32
    %c0_i32_1 = arith.constant 0 : i32
    return %arg0, %c0_i32, %c0_i32_0 : i32, i32, i32
  }
}

</mosaic_0001>

<llo_original>
// kernel: tpu_custom_call.1
$region0: #{tpu_custom_call.1}
  #allocation0 [shape = 'u32[]', space=smem, size = 0x4, offset = 0x4, fixed_abs, tag = 'smem constant byte address 0x4 - core index']
  #allocation1 [shape = 'u32[144,128]{1,0:T(1,128)}', space=vmem, size = 0x12000, scoped, tag = 'internal scratch']
  %s0 = inlined_call_operand.hbm [shape: f32[2,8,256], index: 0, kind: input, shape index: {}]
  %s1 = inlined_call_operand.hbm [shape: f32[9,256], index: 1, kind: input, shape index: {}]
  %s2 = inlined_call_operand.vmem [shape: f32[8,72], index: 2, kind: input, shape index: {}]
  %s3 = inlined_call_operand.vmem [shape: f32[8,1], index: 3, kind: input, shape index: {}]
  %s4 = inlined_call_operand.vmem [shape: f32[8,72], index: 4, kind: input, shape index: {}]
  %s5 = inlined_call_operand.vmem [shape: f32[8,1], index: 5, kind: input, shape index: {}]
  %s6 = inlined_call_operand.hbm [shape: f32[2,8,256], index: 6, kind: output, shape index: {}]
  %s7 = sld [smem:[#allocation0]]
  $region65: #{tpu_custom_call.1} parent=0
    _
  %s9 = ssub.s32 1, %s7
  %s10 = scalar_select 0, %s9, %s7
  $region1: #{tpu_custom_call.1} parent=0
    #allocation2 [shape = 'u8[16384]{0}', space=vmem, size = 0x4000, scoped, tag = 'input window, operand 0']
    #allocation3 [shape = 's32[2]{0}', space=sflag, size = 0x8, scoped, tag = 'scoped memory for tpu_custom_call.1']
    #allocation4 [shape = 's32[2]{0}', space=sflag, size = 0x8, scoped, tag = 'scoped memory for tpu_custom_call.1']
    #allocation5 [shape = 'u8[16384]{0}', space=vmem, size = 0x4000, scoped, tag = 'input window, operand 1, single buffered']
    #allocation6 [shape = 's32[1]{0}', space=sflag, size = 0x4, scoped, tag = 'scoped memory for tpu_custom_call.1']
    #allocation7 [shape = 'u8[16384]{0}', space=vmem, size = 0x4000, scoped, tag = 'output window, operand 0']
    %11 = vsyncpa [#allocation3], 0
    %s12 = scalar_lea.sflag [#allocation3], 1
    %13 = vsyncpa %s12, 0
    %14 = vsyncpa [#allocation6], 0
    %15 = vsyncpa [#allocation4], 0
    %s16 = scalar_lea.sflag [#allocation4], 1
    %17 = vsyncpa %s16, 0
    loop: start=0, step=1, limit=4
    $region2: #{tpu_custom_call.1} parent=1 // loop_pre_header
      _
    $region3: #{tpu_custom_call.1} parent=1 // loop_header
      %s19 = sphi 0, %s23
      %p20 = scmp.ge.s32.totalorder %s19, 4
      %s29 = sphi 0, %s31
      %s32 = sphi 0, %s29
      %s33 = sphi 0, %s32
      %s49 = sphi 0, %s33
      %s53 = sphi 0, %s53
      %s55 = sphi 0, %s53
      %s56 = sphi 0, %s55
      %s70 = sphi 0, %s56
      %s74 = sphi 0, %s74
      %s76 = sphi 0, %s74
      %s77 = sphi 0, %s76
      %s91 = sphi 0, %s77
      %s95 = sphi 0, %s95
      %s97 = sphi 0, %s95
      %s98 = sphi 0, %s97
      %s112 = sphi 0, %s98
      %s116 = sphi 0, %s116
      %s118 = sphi 0, %s116
      %s119 = sphi 0, %s118
      %s133 = sphi 0, %s119
      %s137 = sphi 0, %s137
      %s139 = sphi 0, %s137
      %s140 = sphi 0, %s139
      %s154 = sphi 0, %s140
      %s160 = sphi 0, %s162
      %s163 = sphi 0, %s160
      %s164 = sphi 0, %s163
      %s180 = sphi 0, %s164
    $region4: #{tpu_custom_call.1} parent=1 // loop_header_branch
      %22 = sbr.rel (%p20) target = $region8
    $region5: #{tpu_custom_call.1} parent=1 // loop_body
      %s24 = ssub.s32 %s19, 1
      %s25 = ssub.s32 %s19, 2
      %s26 = sadd.s32 %s19, 1
      %s27 = ssub.s32 %s19, %s26
      %p28 = scmp.eq.s32.totalorder %s27, 0
      %s30 = sadd.s32 %s29, 1
      %s31 = scalar_select %p28, %s29, %s30
      %p34 = pneg %p28
      %p35 = scmp.eq.s32.totalorder %s19, 1
      %p36 = por %p34, %p35
      %p37 = scmp.ne.s32.totalorder %s29, %s32
      %p38 = scmp.eq.s32.totalorder %s19, 0
      %p39 = por %p37, %p38
      %p40 = scmp.ne.s32.totalorder %s29, %s32
      %p41 = scmp.eq.s32.totalorder %s24, 1
      %p42 = por %p40, %p41
      %p43 = scmp.ne.s32.totalorder %s32, %s33
      %p44 = scmp.eq.s32.totalorder %s24, 0
      %p45 = por %p43, %p44
      %p46 = scmp.ne.s32.totalorder %s32, %s33
      %p47 = scmp.eq.s32.totalorder %s25, 1
      %p48 = por %p46, %p47
      %p50 = scmp.ne.s32.totalorder %s33, %s49
      %p51 = scmp.eq.s32.totalorder %s25, 0
      %p52 = por %p50, %p51
      %s54 = sadd.s32 %s53, 1
      %p57 = scmp.eq.s32.totalorder %s19, 1
      %p58 = scmp.ne.s32.totalorder %s53, %s55
      %p59 = scmp.eq.s32.totalorder %s19, 0
      %p60 = por %p58, %p59
      %p61 = scmp.ne.s32.totalorder %s53, %s55
      %p62 = scmp.eq.s32.totalorder %s24, 1
      %p63 = por %p61, %p62
      %p64 = scmp.ne.s32.totalorder %s55, %s56
      %p65 = scmp.eq.s32.totalorder %s24, 0
      %p66 = por %p64, %p65
      %p67 = scmp.ne.s32.totalorder %s55, %s56
      %p68 = scmp.eq.s32.totalorder %s25, 1
      %p69 = por %p67, %p68
      %p71 = scmp.ne.s32.totalorder %s56, %s70
      %p72 = scmp.eq.s32.totalorder %s25, 0
      %p73 = por %p71, %p72
      %s75 = sadd.s32 %s74, 1
      %p78 = scmp.eq.s32.totalorder %s19, 1
      %p79 = scmp.ne.s32.totalorder %s74, %s76
      %p80 = scmp.eq.s32.totalorder %s19, 0
      %p81 = por %p79, %p80
      %p82 = scmp.ne.s32.totalorder %s74, %s76
      %p83 = scmp.eq.s32.totalorder %s24, 1
      %p84 = por %p82, %p83
      %p85 = scmp.ne.s32.totalorder %s76, %s77
      %p86 = scmp.eq.s32.totalorder %s24, 0
      %p87 = por %p85, %p86
      %p88 = scmp.ne.s32.totalorder %s76, %s77
      %p89 = scmp.eq.s32.totalorder %s25, 1
      %p90 = por %p88, %p89
      %p92 = scmp.ne.s32.totalorder %s77, %s91
      %p93 = scmp.eq.s32.totalorder %s25, 0
      %p94 = por %p92, %p93
      %s96 = sadd.s32 %s95, 1
      %p99 = scmp.eq.s32.totalorder %s19, 1
      %p100 = scmp.ne.s32.totalorder %s95, %s97
      %p101 = scmp.eq.s32.totalorder %s19, 0
      %p102 = por %p100, %p101
      %p103 = scmp.ne.s32.totalorder %s95, %s97
      %p104 = scmp.eq.s32.totalorder %s24, 1
      %p105 = por %p103, %p104
      %p106 = scmp.ne.s32.totalorder %s97, %s98
      %p107 = scmp.eq.s32.totalorder %s24, 0
      %p108 = por %p106, %p107
      %p109 = scmp.ne.s32.totalorder %s97, %s98
      %p110 = scmp.eq.s32.totalorder %s25, 1
      %p111 = por %p109, %p110
      %p113 = scmp.ne.s32.totalorder %s98, %s112
      %p114 = scmp.eq.s32.totalorder %s25, 0
      %p115 = por %p113, %p114
      %s117 = sadd.s32 %s116, 1
      %p120 = scmp.eq.s32.totalorder %s19, 1
      %p121 = scmp.ne.s32.totalorder %s116, %s118
      %p122 = scmp.eq.s32.totalorder %s19, 0
      %p123 = por %p121, %p122
      %p124 = scmp.ne.s32.totalorder %s116, %s118
      %p125 = scmp.eq.s32.totalorder %s24, 1
      %p126 = por %p124, %p125
      %p127 = scmp.ne.s32.totalorder %s118, %s119
      %p128 = scmp.eq.s32.totalorder %s24, 0
      %p129 = por %p127, %p128
      %p130 = scmp.ne.s32.totalorder %s118, %s119
      %p131 = scmp.eq.s32.totalorder %s25, 1
      %p132 = por %p130, %p131
      %p134 = scmp.ne.s32.totalorder %s119, %s133
      %p135 = scmp.eq.s32.totalorder %s25, 0
      %p136 = por %p134, %p135
      %s138 = sadd.s32 %s137, 1
      %p141 = scmp.eq.s32.totalorder %s19, 1
      %p142 = scmp.ne.s32.totalorder %s137, %s139
      %p143 = scmp.eq.s32.totalorder %s19, 0
      %p144 = por %p142, %p143
      %p145 = scmp.ne.s32.totalorder %s137, %s139
      %p146 = scmp.eq.s32.totalorder %s24, 1
      %p147 = por %p145, %p146
      %p148 = scmp.ne.s32.totalorder %s139, %s140
      %p149 = scmp.eq.s32.totalorder %s24, 0
      %p150 = por %p148, %p149
      %p151 = scmp.ne.s32.totalorder %s139, %s140
      %p152 = scmp.eq.s32.totalorder %s25, 1
      %p153 = por %p151, %p152
      %p155 = scmp.ne.s32.totalorder %s140, %s154
      %p156 = scmp.eq.s32.totalorder %s25, 0
      %p157 = por %p155, %p156
      %s158 = ssub.s32 %s19, %s26
      %p159 = scmp.eq.s32.totalorder %s158, 0
      %s161 = sadd.s32 %s160, 1
      %s162 = scalar_select %p159, %s160, %s161
      %p165 = pneg %p159
      %p166 = scmp.eq.s32.totalorder %s19, 1
      %p167 = por %p165, %p166
      %p168 = scmp.ne.s32.totalorder %s160, %s163
      %p169 = scmp.eq.s32.totalorder %s19, 0
      %p170 = por %p168, %p169
      %p171 = scmp.ne.s32.totalorder %s160, %s163
      %p172 = scmp.eq.s32.totalorder %s24, 1
      %p173 = por %p171, %p172
      %p174 = scmp.ne.s32.totalorder %s163, %s164
      %p175 = scmp.eq.s32.totalorder %s24, 0
      %p176 = por %p174, %p175
      %p177 = scmp.ne.s32.totalorder %s163, %s164
      %p178 = scmp.eq.s32.totalorder %s25, 1
      %p179 = por %p177, %p178
      %p181 = scmp.ne.s32.totalorder %s164, %s180
      %p182 = scmp.eq.s32.totalorder %s25, 0
      %p183 = por %p181, %p182
      %p184 = scmp.le.s32.totalorder 1, %s19
      %p185 = scmp.lt.s32.totalorder %s19, 3
      %p186 = pnand %p184, %p185
      %p187 = pneg %p186
      // Predicated region
      $region9: #{tpu_custom_call.1} parent=5 // pred_check
        _
      $region10: #{tpu_custom_call.1} parent=5 // pred_check_branch
        %189 = sbr.rel (%p186) target = $region12
      $region11: #{tpu_custom_call.1} parent=5 // pred_region
        %s190 = ssub.s32 %s19, 1
        // Predicated region
        $region13: #{tpu_custom_call.1} parent=11 // pred_check
          %p191 = pneg %p66
        $region14: #{tpu_custom_call.1} parent=11 // pred_check_branch
          %193 = sbr.rel (%p191) target = $region16
        $region15: #{tpu_custom_call.1} parent=11 // pred_region
          %s195 = ssub.s32 512, 512
          %196 = vsyncadd [#allocation6], %s195
          %s197 = sshll.u32 [#allocation5], 4
          %s198 = int_to_ptr.vmem [resolvable:$true] %s197
          %203 = dma.hbm_to_vmem [thread:$0]  %s1, 512, %s198, [#allocation6], 256, 256, 16
        $region16: #{tpu_custom_call.1} parent=11 // pred_fallthru
          _
        // Predicated region
        $region17: #{tpu_custom_call.1} parent=11 // pred_check
          %p204 = pneg %p87
        $region18: #{tpu_custom_call.1} parent=11 // pred_check_branch
          %206 = sbr.rel (%p204) target = $region20
        $region19: #{tpu_custom_call.1} parent=11 // pred_region
          _
        $region20: #{tpu_custom_call.1} parent=11 // pred_fallthru
          _
        // Predicated region
        $region21: #{tpu_custom_call.1} parent=11 // pred_check
          %p207 = pneg %p108
        $region22: #{tpu_custom_call.1} parent=11 // pred_check_branch
          %209 = sbr.rel (%p207) target = $region24
        $region23: #{tpu_custom_call.1} parent=11 // pred_region
          _
        $region24: #{tpu_custom_call.1} parent=11 // pred_fallthru
          _
        // Predicated region
        $region25: #{tpu_custom_call.1} parent=11 // pred_check
          %p210 = pneg %p129
        $region26: #{tpu_custom_call.1} parent=11 // pred_check_branch
          %212 = sbr.rel (%p210) target = $region28
        $region27: #{tpu_custom_call.1} parent=11 // pred_region
          _
        $region28: #{tpu_custom_call.1} parent=11 // pred_fallthru
          _
        // Predicated region
        $region29: #{tpu_custom_call.1} parent=11 // pred_check
          %p213 = pneg %p150
        $region30: #{tpu_custom_call.1} parent=11 // pred_check_branch
          %215 = sbr.rel (%p213) target = $region32
        $region31: #{tpu_custom_call.1} parent=11 // pred_region
          _
        $region32: #{tpu_custom_call.1} parent=11 // pred_fallthru
          _
      $region12: #{tpu_custom_call.1} parent=5 // pred_fallthru
        _
      %p216 = scmp.lt.s32.totalorder %s19, 2
      // Predicated region
      $region33: #{tpu_custom_call.1} parent=5 // pred_check
        %p217 = pneg %p216
      $region34: #{tpu_custom_call.1} parent=5 // pred_check_branch
        %219 = sbr.rel (%p217) target = $region36
      $region35: #{tpu_custom_call.1} parent=5 // pred_region
        // Predicated region
        $region37: #{tpu_custom_call.1} parent=35 // pred_check
          %p220 = pneg %p39
        $region38: #{tpu_custom_call.1} parent=35 // pred_check_branch
          %222 = sbr.rel (%p220) target = $region40
        $region39: #{tpu_custom_call.1} parent=35 // pred_region
          %s223 = sand.u32 %s29, 1
          %s224 = scalar_lea.sflag [#allocation3], %s223
          %s225 = sand.u32 %s29, 1
          %s226 = smul.addr %s225, 16
          %s227 = scalar_lea.vmem [#allocation2], %s226
          %s229 = ssub.s32 256, 256
          %230 = vsyncadd %s224, %s229
          %s231 = smul.addr %s19, 2
          %s232 = smul.addr %s231, 128
          %s233 = scalar_lea.hbm %s0, %s232
          %s235 = sshll.u32 %s227, 4
          %s236 = int_to_ptr.vmem [resolvable:$true] %s235
          %238 = dma.hbm_to_vmem [thread:$0]  %s233, 256, %s236, %s224
        $region40: #{tpu_custom_call.1} parent=35 // pred_fallthru
          _
      $region36: #{tpu_custom_call.1} parent=5 // pred_fallthru
        _
      %p239 = scmp.le.s32.totalorder 1, %s19
      %p240 = scmp.lt.s32.totalorder %s19, 3
      %p241 = pnand %p239, %p240
      %p242 = pneg %p241
      // Predicated region
      $region41: #{tpu_custom_call.1} parent=5 // pred_check
        _
      $region42: #{tpu_custom_call.1} parent=5 // pred_check_branch
        %244 = sbr.rel (%p241) target = $region44
      $region43: #{tpu_custom_call.1} parent=5 // pred_region
        %s245 = ssub.s32 %s19, 1
        %s246 = sand.u32 %s32, 1
        %s247 = scalar_lea.sflag [#allocation3], %s246
        %s248 = sand.u32 %s32, 1
        %s249 = smul.addr %s248, 16
        %s250 = scalar_lea.vmem [#allocation2], %s249
        // Predicated region
        $region45: #{tpu_custom_call.1} parent=43 // pred_check
          %p251 = pneg %p45
        $region46: #{tpu_custom_call.1} parent=43 // pred_check_branch
          %253 = sbr.rel (%p251) target = $region48
        $region47: #{tpu_custom_call.1} parent=43 // pred_region
          %254 = dma.done %s247, 256
        $region48: #{tpu_custom_call.1} parent=43 // pred_fallthru
          _
        // Predicated region
        $region49: #{tpu_custom_call.1} parent=43 // pred_check
          %p255 = pneg %p66
        $region50: #{tpu_custom_call.1} parent=43 // pred_check_branch
          %257 = sbr.rel (%p255) target = $region52
        $region51: #{tpu_custom_call.1} parent=43 // pred_region
          %258 = dma.done [#allocation6], 512
        $region52: #{tpu_custom_call.1} parent=43 // pred_fallthru
          _
        %s259 = sand.u32 %s32, 1
        %s260 = scalar_lea.sflag [#allocation3], %s259
        %s261 = sand.u32 %s32, 1
        %s262 = smul.addr %s261, 16
        %s263 = scalar_lea.vmem [#allocation2], %s262
        %p264 = pneg %p45
        %p265 = pneg %p42
        %p266 = pneg %p66
        %p267 = pneg %p63
        %p268 = pneg %p87
        %p269 = pneg %p84
        %p270 = pneg %p108
        %p271 = pneg %p105
        %p272 = pneg %p129
        %p273 = pneg %p126
        %p274 = pneg %p150
        %p275 = pneg %p147
        %p276 = pneg %p176
        %p277 = pneg %p173
        %s278 = sand.u32 %s163, 1
        %s279 = scalar_lea.sflag [#allocation4], %s278
        %s280 = sand.u32 %s163, 1
        %s281 = smul.addr %s280, 16
        %s282 = scalar_lea.vmem [#allocation7], %s281
        %v283 = vld [vmem:[%s250] sm:$0xff]
        %v284 = vld [vmem:[%s250 + $0x8] sm:$0xff]
        %v285 = vld [vmem:[%s3] sm:$0xff]
        %286 = vrot.lane.b32.xlu0 %v283, 17
        %v287 = vpop.permute.xlu0 %286
        %288 = vrot.lane.b32.xlu0 %v284, 17
        %v289 = vpop.permute.xlu0 %288
        %v290 = vlaneseq
        %v291 = vand.u32 %v290, 127
        %vm292 = vcmp.lt.s32.totalorder %v291, 17
        %v293 = vsel %vm292, %v287, %v289
        %v294 = vsel %vm292, %v289, %v287
        %v295 = vld [vmem:[#allocation5] ss:$8 sm:$0x3]
        %v297 = vlaneseq
        %v298 = vshrl.u32 %v297, 7
        %v299 = vsub.s32 0, %v298
        %v300 = vrot.slane %v295, %v299
        %v301 = vlaneseq
        %v302 = vshrl.u32 %v301, 7
        %v303 = vsub.s32 1, %v302
        %v304 = vrot.slane %v295, %v303
        %v307 = vmul.f32 %v294, %v300
        %v308 = vmul.f32 %v293, %v304
        %309 = vrot.lane.b32.xlu0 %v283, 16
        %v310 = vpop.permute.xlu0 %309
        %311 = vrot.lane.b32.xlu0 %v284, 16
        %v312 = vpop.permute.xlu0 %311
        %vm313 = vcmp.lt.s32.totalorder %v291, 16
        %v314 = vsel %vm313, %v310, %v312
        %v315 = vsel %vm313, %v312, %v310
        %s316 = scalar_lea.vmem [#allocation5], 1
        %v317 = vld [vmem:[%s316] ss:$8 sm:$0x3]
        %v319 = vlaneseq
        %v320 = vshrl.u32 %v319, 7
        %v321 = vsub.s32 0, %v320
        %v322 = vrot.slane %v317, %v321
        %v323 = vlaneseq
        %v324 = vshrl.u32 %v323, 7
        %v325 = vsub.s32 1, %v324
        %v326 = vrot.slane %v317, %v325
        %v329 = vmul.f32 %v315, %v322
        %v330 = vmul.f32 %v314, %v326
        %331 = vrot.lane.b32.xlu0 %v283, 15
        %v332 = vpop.permute.xlu0 %331
        %333 = vrot.lane.b32.xlu0 %v284, 15
        %v334 = vpop.permute.xlu0 %333
        %vm335 = vcmp.lt.s32.totalorder %v291, 15
        %v336 = vsel %vm335, %v332, %v334
        %v337 = vsel %vm335, %v334, %v332
        %s338 = scalar_lea.vmem [#allocation5], 2
        %v339 = vld [vmem:[%s338] ss:$8 sm:$0x3]
        %v341 = vlaneseq
        %v342 = vshrl.u32 %v341, 7
        %v343 = vsub.s32 0, %v342
        %v344 = vrot.slane %v339, %v343
        %v345 = vlaneseq
        %v346 = vshrl.u32 %v345, 7
        %v347 = vsub.s32 1, %v346
        %v348 = vrot.slane %v339, %v347
        %v351 = vmul.f32 %v337, %v344
        %v352 = vmul.f32 %v336, %v348
        %353 = vrot.lane.b32.xlu0 %v283, 1
        %v354 = vpop.permute.xlu0 %353
        %355 = vrot.lane.b32.xlu0 %v284, 1
        %v356 = vpop.permute.xlu0 %355
        %vm357 = vcmp.lt.s32.totalorder %v291, 1
        %v358 = vsel %vm357, %v354, %v356
        %v359 = vsel %vm357, %v356, %v354
        %s360 = scalar_lea.vmem [#allocation5], 3
        %v361 = vld [vmem:[%s360] ss:$8 sm:$0x3]
        %v363 = vlaneseq
        %v364 = vshrl.u32 %v363, 7
        %v365 = vsub.s32 0, %v364
        %v366 = vrot.slane %v361, %v365
        %v367 = vlaneseq
        %v368 = vshrl.u32 %v367, 7
        %v369 = vsub.s32 1, %v368
        %v370 = vrot.slane %v361, %v369
        %v373 = vmul.f32 %v359, %v366
        %v374 = vmul.f32 %v358, %v370
        %375 = vrot.lane.b32.xlu0 %v283, 127
        %v376 = vpop.permute.xlu0 %375
        %377 = vrot.lane.b32.xlu0 %v284, 127
        %v378 = vpop.permute.xlu0 %377
        %vm379 = vcmp.lt.s32.totalorder %v291, 127
        %v380 = vsel %vm379, %v376, %v378
        %v381 = vsel %vm379, %v378, %v376
        %s382 = scalar_lea.vmem [#allocation5], 5
        %v383 = vld [vmem:[%s382] ss:$8 sm:$0x3]
        %v385 = vlaneseq
        %v386 = vshrl.u32 %v385, 7
        %v387 = vsub.s32 0, %v386
        %v388 = vrot.slane %v383, %v387
        %v389 = vlaneseq
        %v390 = vshrl.u32 %v389, 7
        %v391 = vsub.s32 1, %v390
        %v392 = vrot.slane %v383, %v391
        %v395 = vmul.f32 %v380, %v388
        %v396 = vmul.f32 %v381, %v392
        %397 = vrot.lane.b32.xlu0 %v283, 113
        %v398 = vpop.permute.xlu0 %397
        %399 = vrot.lane.b32.xlu0 %v284, 113
        %v400 = vpop.permute.xlu0 %399
        %vm401 = vcmp.lt.s32.totalorder %v291, 113
        %v402 = vsel %vm401, %v398, %v400
        %v403 = vsel %vm401, %v400, %v398
        %s404 = scalar_lea.vmem [#allocation5], 6
        %v405 = vld [vmem:[%s404] ss:$8 sm:$0x3]
        %v407 = vlaneseq
        %v408 = vshrl.u32 %v407, 7
        %v409 = vsub.s32 0, %v408
        %v410 = vrot.slane %v405, %v409
        %v411 = vlaneseq
        %v412 = vshrl.u32 %v411, 7
        %v413 = vsub.s32 1, %v412
        %v414 = vrot.slane %v405, %v413
        %v417 = vmul.f32 %v402, %v410
        %v418 = vmul.f32 %v403, %v414
        %419 = vrot.lane.b32.xlu0 %v283, 112
        %v420 = vpop.permute.xlu0 %419
        %421 = vrot.lane.b32.xlu0 %v284, 112
        %v422 = vpop.permute.xlu0 %421
        %vm423 = vcmp.lt.s32.totalorder %v291, 112
        %v424 = vsel %vm423, %v420, %v422
        %v425 = vsel %vm423, %v422, %v420
        %s426 = scalar_lea.vmem [#allocation5], 7
        %v427 = vld [vmem:[%s426] ss:$8 sm:$0x3]
        %v429 = vlaneseq
        %v430 = vshrl.u32 %v429, 7
        %v431 = vsub.s32 0, %v430
        %v432 = vrot.slane %v427, %v431
        %v433 = vlaneseq
        %v434 = vshrl.u32 %v433, 7
        %v435 = vsub.s32 1, %v434
        %v436 = vrot.slane %v427, %v435
        %v439 = vmul.f32 %v424, %v432
        %v440 = vmul.f32 %v425, %v436
        %441 = vrot.lane.b32.xlu0 %v283, 111
        %v442 = vpop.permute.xlu0 %441
        %443 = vrot.lane.b32.xlu0 %v284, 111
        %v444 = vpop.permute.xlu0 %443
        %vm445 = vcmp.lt.s32.totalorder %v291, 111
        %v446 = vsel %vm445, %v442, %v444
        %v447 = vsel %vm445, %v444, %v442
        %s448 = scalar_lea.vmem [#allocation5], 16
        %v449 = vld [vmem:[%s448] ss:$8 sm:$0x3]
        %v451 = vlaneseq
        %v452 = vshrl.u32 %v451, 7
        %v453 = vsub.s32 0, %v452
        %v454 = vrot.slane %v449, %v453
        %v455 = vlaneseq
        %v456 = vshrl.u32 %v455, 7
        %v457 = vsub.s32 1, %v456
        %v458 = vrot.slane %v449, %v457
        %v461 = vmul.f32 %v446, %v454
        %v462 = vmul.f32 %v447, %v458
        %v463 = vld [vmem:[%s2] sm:$0xff]
        %465 = vset.pattern.permute.xlu0 0
        %466 = vperm.xlu0 %465, %v285
        %v467 = vpop.permute.xlu0 %466
        %vm469 = vcmask 588800
        %v471 = vsel %vm469, %v463, 0
        %473 = vmatprep.subr.mxu0 %v308
        %474 = vmatpush1.msra.mxu0 %v307
        %475 = vmatprep.subr.mxu0 %v330
        %476 = vmatpush1.msra.mxu0 %v329
        %477 = vmatprep.subr.mxu0 %v352
        %478 = vmatpush1.msra.mxu0 %v351
        %479 = vmatprep.subr.mxu0 %v374
        %480 = vmatpush1.msra.mxu0 %v373
        %481 = vmatprep.subr.mxu0 %v284
        %482 = vmatpush1.msra.mxu0 %v283
        %483 = vmatprep.subr.mxu0 %v396
        %484 = vmatpush1.msra.mxu0 %v395
        %485 = vmatprep.subr.mxu0 %v418
        %486 = vmatpush1.msra.mxu0 %v417
        %487 = vmatprep.subr.mxu0 %v440
        %488 = vmatpush1.msra.mxu0 %v439
        %489 = vmatprep.subr.mxu0 %v462
        %490 = vmatpush1.msra.mxu0 %v461
        %491 = vmatprep.subr.mxu0 0.0
        %492 = vmatpush1.msra.mxu0 0.0
        %493 = vmatprep.subr.mxu0 0.0
        %494 = vmatpush1.msra.mxu0 0.0
        %495 = vmatprep.subr.mxu0 0.0
        %496 = vmatpush1.msra.mxu0 0.0
        %497 = vmatprep.subr.mxu0 0.0
        %498 = vmatpush1.msra.mxu0 0.0
        %499 = vmatprep.subr.mxu0 0.0
        %500 = vmatpush1.msra.mxu0 0.0
        %501 = vmatprep.subr.mxu0 0.0
        %502 = vmatpush1.msra.mxu0 0.0
        %503 = vmatprep.subr.mxu0 0.0
        %504 = vmatpush1.msra.mxu0 0.0
        %505 = vmatprep.subr.mxu0 0.0
        %506 = vmatpush1.msra.mxu0 0.0
        %507 = vmatprep.subr.mxu0 0.0
        %508 = vmatpush1.msra.mxu0 0.0
        %509 = vmatprep.subr.mxu0 0.0
        %510 = vmatpush1.msra.mxu0 0.0
        %511 = vmatprep.subr.mxu0 0.0
        %512 = vmatpush1.msra.mxu0 0.0
        %513 = vmatprep.subr.mxu0 0.0
        %514 = vmatpush1.msra.mxu0 0.0
        %515 = vmatprep.subr.mxu0 0.0
        %516 = vmatpush1.msra.mxu0 0.0
        %517 = vmatprep.subr.mxu0 0.0
        %518 = vmatpush1.msra.mxu0 0.0
        %519 = vmatprep.subr.mxu0 0.0
        %520 = vmatpush1.msra.mxu0 0.0
        %521 = vmatprep.subr.mxu0 0.0
        %522 = vmatpush1.msra.mxu0 0.0
        %523 = vmatprep.subr.mxu0 0.0
        %524 = vmatpush1.msra.mxu0 0.0
        %525 = vmatprep.subr.mxu0 0.0
        %526 = vmatpush1.msra.mxu0 0.0
        %527 = vmatprep.subr.mxu0 0.0
        %528 = vmatpush1.msra.mxu0 0.0
        %529 = vmatprep.subr.mxu0 0.0
        %530 = vmatpush1.msra.mxu0 0.0
        %531 = vmatprep.subr.mxu0 0.0
        %532 = vmatpush1.msra.mxu0 0.0
        %533 = vmatprep.subr.mxu0 0.0
        %534 = vmatpush1.msra.mxu0 0.0
        %535 = vmatprep.subr.mxu0 0.0
        %536 = vmatpush1.msra.mxu0 0.0
        %537 = vmatprep.mubr.f32.mxu0 0.0
        %538 = vmatmul.mubr.f32.gmra.mrb[0].mxu0 %v471
        %v539 = vpop.f32.mrb[0].mxu0
        %v540 = vadd.f32 %v467, %v539
        %v541 = vpop.f32.mrb[0].mxu0
        %v542 = vadd.f32 %v467, %v541
        %543 = vdwg.mxu0
        %v544 = vmax.f32 %v540, 0.0
        %v545 = vmax.f32 %v542, 0.0
        %v546 = vld [vmem:[%s5] sm:$0xff]
        %547 = vrot.lane.b32.xlu0 %v544, 17
        %v548 = vpop.permute.xlu0 %547
        %549 = vrot.lane.b32.xlu0 %v545, 17
        %v550 = vpop.permute.xlu0 %549
        %v551 = vsel %vm292, %v548, %v550
        %v552 = vsel %vm292, %v550, %v548
        %v553 = vmul.f32 %v552, %v300
        %v554 = vmul.f32 %v551, %v304
        %555 = vrot.lane.b32.xlu0 %v544, 16
        %v556 = vpop.permute.xlu0 %555
        %557 = vrot.lane.b32.xlu0 %v545, 16
        %v558 = vpop.permute.xlu0 %557
        %v559 = vsel %vm313, %v556, %v558
        %v560 = vsel %vm313, %v558, %v556
        %v561 = vmul.f32 %v560, %v322
        %v562 = vmul.f32 %v559, %v326
        %563 = vrot.lane.b32.xlu0 %v544, 15
        %v564 = vpop.permute.xlu0 %563
        %565 = vrot.lane.b32.xlu0 %v545, 15
        %v566 = vpop.permute.xlu0 %565
        %v567 = vsel %vm335, %v564, %v566
        %v568 = vsel %vm335, %v566, %v564
        %v569 = vmul.f32 %v568, %v344
        %v570 = vmul.f32 %v567, %v348
        %571 = vrot.lane.b32.xlu0 %v544, 1
        %v572 = vpop.permute.xlu0 %571
        %573 = vrot.lane.b32.xlu0 %v545, 1
        %v574 = vpop.permute.xlu0 %573
        %v575 = vsel %vm357, %v572, %v574
        %v576 = vsel %vm357, %v574, %v572
        %v577 = vmul.f32 %v576, %v366
        %v578 = vmul.f32 %v575, %v370
        %579 = vrot.lane.b32.xlu0 %v544, 127
        %v580 = vpop.permute.xlu0 %579
        %581 = vrot.lane.b32.xlu0 %v545, 127
        %v582 = vpop.permute.xlu0 %581
        %v583 = vsel %vm379, %v580, %v582
        %v584 = vsel %vm379, %v582, %v580
        %v585 = vmul.f32 %v583, %v388
        %v586 = vmul.f32 %v584, %v392
        %587 = vrot.lane.b32.xlu0 %v544, 113
        %v588 = vpop.permute.xlu0 %587
        %589 = vrot.lane.b32.xlu0 %v545, 113
        %v590 = vpop.permute.xlu0 %589
        %v591 = vsel %vm401, %v588, %v590
        %v592 = vsel %vm401, %v590, %v588
        %v593 = vmul.f32 %v591, %v410
        %v594 = vmul.f32 %v592, %v414
        %595 = vrot.lane.b32.xlu0 %v544, 112
        %v596 = vpop.permute.xlu0 %595
        %597 = vrot.lane.b32.xlu0 %v545, 112
        %v598 = vpop.permute.xlu0 %597
        %v599 = vsel %vm423, %v596, %v598
        %v600 = vsel %vm423, %v598, %v596
        %v601 = vmul.f32 %v599, %v432
        %v602 = vmul.f32 %v600, %v436
        %603 = vrot.lane.b32.xlu0 %v544, 111
        %v604 = vpop.permute.xlu0 %603
        %605 = vrot.lane.b32.xlu0 %v545, 111
        %v606 = vpop.permute.xlu0 %605
        %v607 = vsel %vm445, %v604, %v606
        %v608 = vsel %vm445, %v606, %v604
        %v609 = vmul.f32 %v607, %v454
        %v610 = vmul.f32 %v608, %v458
        %v611 = vld [vmem:[%s4] sm:$0xff]
        %613 = vset.pattern.permute.xlu0 0
        %614 = vperm.xlu0 %613, %v546
        %v615 = vpop.permute.xlu0 %614
        %v618 = vsel %vm469, %v611, 0
        %620 = vmatprep.subr.mxu0 %v554
        %621 = vmatpush1.msra.mxu0 %v553
        %622 = vmatprep.subr.mxu0 %v562
        %623 = vmatpush1.msra.mxu0 %v561
        %624 = vmatprep.subr.mxu0 %v570
        %625 = vmatpush1.msra.mxu0 %v569
        %626 = vmatprep.subr.mxu0 %v578
        %627 = vmatpush1.msra.mxu0 %v577
        %628 = vmatprep.subr.mxu0 %v545
        %629 = vmatpush1.msra.mxu0 %v544
        %630 = vmatprep.subr.mxu0 %v586
        %631 = vmatpush1.msra.mxu0 %v585
        %632 = vmatprep.subr.mxu0 %v594
        %633 = vmatpush1.msra.mxu0 %v593
        %634 = vmatprep.subr.mxu0 %v602
        %635 = vmatpush1.msra.mxu0 %v601
        %636 = vmatprep.subr.mxu0 %v610
        %637 = vmatpush1.msra.mxu0 %v609
        %638 = vmatprep.subr.mxu0 0.0
        %639 = vmatpush1.msra.mxu0 0.0
        %640 = vmatprep.subr.mxu0 0.0
        %641 = vmatpush1.msra.mxu0 0.0
        %642 = vmatprep.subr.mxu0 0.0
        %643 = vmatpush1.msra.mxu0 0.0
        %644 = vmatprep.subr.mxu0 0.0
        %645 = vmatpush1.msra.mxu0 0.0
        %646 = vmatprep.subr.mxu0 0.0
        %647 = vmatpush1.msra.mxu0 0.0
        %648 = vmatprep.subr.mxu0 0.0
        %649 = vmatpush1.msra.mxu0 0.0
        %650 = vmatprep.subr.mxu0 0.0
        %651 = vmatpush1.msra.mxu0 0.0
        %652 = vmatprep.subr.mxu0 0.0
        %653 = vmatpush1.msra.mxu0 0.0
        %654 = vmatprep.subr.mxu0 0.0
        %655 = vmatpush1.msra.mxu0 0.0
        %656 = vmatprep.subr.mxu0 0.0
        %657 = vmatpush1.msra.mxu0 0.0
        %658 = vmatprep.subr.mxu0 0.0
        %659 = vmatpush1.msra.mxu0 0.0
        %660 = vmatprep.subr.mxu0 0.0
        %661 = vmatpush1.msra.mxu0 0.0
        %662 = vmatprep.subr.mxu0 0.0
        %663 = vmatpush1.msra.mxu0 0.0
        %664 = vmatprep.subr.mxu0 0.0
        %665 = vmatpush1.msra.mxu0 0.0
        %666 = vmatprep.subr.mxu0 0.0
        %667 = vmatpush1.msra.mxu0 0.0
        %668 = vmatprep.subr.mxu0 0.0
        %669 = vmatpush1.msra.mxu0 0.0
        %670 = vmatprep.subr.mxu0 0.0
        %671 = vmatpush1.msra.mxu0 0.0
        %672 = vmatprep.subr.mxu0 0.0
        %673 = vmatpush1.msra.mxu0 0.0
        %674 = vmatprep.subr.mxu0 0.0
        %675 = vmatpush1.msra.mxu0 0.0
        %676 = vmatprep.subr.mxu0 0.0
        %677 = vmatpush1.msra.mxu0 0.0
        %678 = vmatprep.subr.mxu0 0.0
        %679 = vmatpush1.msra.mxu0 0.0
        %680 = vmatprep.subr.mxu0 0.0
        %681 = vmatpush1.msra.mxu0 0.0
        %682 = vmatprep.subr.mxu0 0.0
        %683 = vmatpush1.msra.mxu0 0.0
        %684 = vmatprep.mubr.f32.mxu0 0.0
        %685 = vmatmul.mubr.f32.gmra.mrb[0].mxu0 %v618
        %v686 = vpop.f32.mrb[0].mxu0
        %v687 = vadd.f32 %v615, %v686
        %v688 = vpop.f32.mrb[0].mxu0
        %v689 = vadd.f32 %v615, %v688
        %690 = vdwg.mxu0
        %v691 = vmax.f32 %v687, 0.0
        %v692 = vmax.f32 %v689, 0.0
        %693 = vst [vmem:[%s282] sm:$0xff] %v691
        %694 = vst [vmem:[%s282 + $0x8] sm:$0xff] %v692
        %s695 = sand.u32 %s163, 1
        %s696 = scalar_lea.sflag [#allocation4], %s695
        %s697 = sand.u32 %s163, 1
        %s698 = smul.addr %s697, 16
        %s699 = scalar_lea.vmem [#allocation7], %s698
        // Predicated region
        $region53: #{tpu_custom_call.1} parent=43 // pred_check
          %p700 = pneg %p173
        $region54: #{tpu_custom_call.1} parent=43 // pred_check_branch
          %702 = sbr.rel (%p700) target = $region56
        $region55: #{tpu_custom_call.1} parent=43 // pred_region
          %s704 = ssub.s32 256, 256
          %705 = vsyncadd %s696, %s704
          %s706 = smul.addr %s24, 2
          %s707 = smul.addr %s706, 128
          %s708 = scalar_lea.hbm %s6, %s707
          %s710 = sshll.u32 %s699, 4
          %s711 = int_to_ptr.vmem [resolvable:$true] %s710
          %713 = dma.vmem_to_hbm [thread:$0]  %s711, 256, %s708, %s696
        $region56: #{tpu_custom_call.1} parent=43 // pred_fallthru
          _
      $region44: #{tpu_custom_call.1} parent=5 // pred_fallthru
        _
      %p714 = scmp.le.s32.totalorder 2, %s19
      // Predicated region
      $region57: #{tpu_custom_call.1} parent=5 // pred_check
        %p715 = pneg %p714
      $region58: #{tpu_custom_call.1} parent=5 // pred_check_branch
        %717 = sbr.rel (%p715) target = $region60
      $region59: #{tpu_custom_call.1} parent=5 // pred_region
        %s718 = ssub.s32 %s19, 2
        // Predicated region
        $region61: #{tpu_custom_call.1} parent=59 // pred_check
          %p719 = pneg %p179
        $region62: #{tpu_custom_call.1} parent=59 // pred_check_branch
          %721 = sbr.rel (%p719) target = $region64
        $region63: #{tpu_custom_call.1} parent=59 // pred_region
          %s722 = sand.u32 %s164, 1
          %s723 = scalar_lea.sflag [#allocation4], %s722
          %s724 = sand.u32 %s164, 1
          %s725 = smul.addr %s724, 16
          %s726 = scalar_lea.vmem [#allocation7], %s725
          %727 = dma.done %s723, 256
        $region64: #{tpu_custom_call.1} parent=59 // pred_fallthru
          _
      $region60: #{tpu_custom_call.1} parent=5 // pred_fallthru
        _
    $region6: #{tpu_custom_call.1} parent=1 // loop_footer
      %s23 = sadd.s32 1, %s19
    $region7: #{tpu_custom_call.1} parent=1 // loop_footer_branch
      %18 = sbr.rel target = $region3
    $region8: #{tpu_custom_call.1} parent=1 // loop_exit
      _
    %728 = vsyncpa [#allocation3], 1
    %s729 = scalar_lea.sflag [#allocation3], 1
    %730 = vsyncpa %s729, 1
    %731 = vsyncpa [#allocation6], 1
    %732 = vsyncpa [#allocation4], 1
    %s733 = scalar_lea.sflag [#allocation4], 1
    %734 = vsyncpa %s733, 1

</llo_original>
